<compile_context>
chip_gen: v5e
topology: v5e:2x2
jax: 0.10.0
libtpu: 0.0.40
codegen_flags: <defaults>
</compile_context>

<pallas_src>
import functools

import jax
import jax.numpy as jnp
from jax import lax
from jax.experimental import pallas as pl
from jax.experimental.pallas import tpu as pltpu

_NEG_BIG = -1e30  # large negative (not -inf) to avoid inf-inf NaNs


def _round_up(x, m):
    return (x + m - 1) // m * m


def _ntxent_lse_kernel(q_ref, c_ref, lse_ref, m_ref, l_ref, *,
                       n2, tq, tc, inv_t, use_cosine, n_pad_cols):
    """Per-row logsumexp of sim(reps, reps)/T with the main diagonal (and
    padded columns) excluded."""
    i = pl.program_id(0)          # row-tile index    ("parallel")
    k = pl.program_id(1)          # column-tile index ("arbitrary", reduction)
    nk = pl.num_programs(1)
    r0 = i * tq
    c0 = k * tc

    @pl.when(k == 0)
    def _init():
        l_ref[...] = jnp.zeros((tq, 1), jnp.float32)
        if not use_cosine:
            m_ref[...] = jnp.full((tq, 1), _NEG_BIG, jnp.float32)

    # MXU: contract on D with both operands in natural (rows, D) layout.
    # Operands may be bf16; accumulate in f32.
    s = lax.dot_general(q_ref[...], c_ref[...], (((1,), (1,)), ((), ())),
                        preferred_element_type=jnp.float32)        # (tq, tc)

    if use_cosine:
        # cosine sim <= 1  =>  analytic shift 1/T: no max pass, no select.
        e = jnp.exp(s * inv_t - inv_t)                             # f32
        l_ref[...] += jnp.sum(e, axis=-1, keepdims=True)

        # Correction: subtract the invalid (self-similarity / padded-column)
        # contributions only on the few tiles that contain them.
        diag_hit = jnp.logical_and(r0 < c0 + tc, c0 < r0 + tq)
        need_fix = diag_hit
        if n_pad_cols > 0:
            need_fix = jnp.logical_or(need_fix, k == nk - 1)

        @pl.when(need_fix)
        def _correct():
            rows = r0 + lax.broadcasted_iota(jnp.int32, (tq, tc), 0)
            cols = c0 + lax.broadcasted_iota(jnp.int32, (tq, tc), 1)
            invalid = rows == cols
            if n_pad_cols > 0:
                invalid = jnp.logical_or(invalid, cols >= n2)
            l_ref[...] -= jnp.sum(jnp.where(invalid, e, 0.0), axis=-1,
                                  keepdims=True)

        @pl.when(k == nk - 1)
        def _finalize():
            lse_ref[...] = jnp.log(l_ref[...]) + inv_t
    else:
        # Dot-product path: mask before the running max (self dot products can
        # dominate; keep exact flash-style online LSE).
        rows = r0 + lax.broadcasted_iota(jnp.int32, (tq, tc), 0)
        cols = c0 + lax.broadcasted_iota(jnp.int32, (tq, tc), 1)
        invalid = rows == cols
        if n_pad_cols > 0:
            invalid = jnp.logical_or(invalid, cols >= n2)
        scaled = jnp.where(invalid, jnp.float32(_NEG_BIG), s * inv_t)
        # NOTE: a fully-masked first column tile (m stuck at _NEG_BIG) is
        # unreachable with this padding scheme for any n2 >= 2.
        m_new = jnp.maximum(m_ref[...], jnp.max(scaled, axis=-1, keepdims=True))
        alpha = jnp.exp(m_ref[...] - m_new)
        l_ref[...] = (alpha * l_ref[...]
                      + jnp.sum(jnp.exp(scaled - m_new), axis=-1, keepdims=True))
        m_ref[...] = m_new

        @pl.when(k == nk - 1)
        def _finalize():
            lse_ref[...] = jnp.log(l_ref[...]) + m_ref[...]


def _vmem_estimate(tq, tc, d, in_itemsize):
    # double-buffered row/col input blocks + f32 s/e intermediates
    # + output block + (m, l) scratch.
    return (2 * (tq + tc) * d * in_itemsize
            + 2 * tq * tc * 4
            + 2 * tq * 4
            + 4 * tq * 4)


def _pick_tiles(n2, d, row_tile, col_tile, in_itemsize,
                vmem_budget=36 * 2 ** 20):
    """Row tile multiple of 8; col tile a multiple of the row tile (so one
    padded column extent also covers all row tiles).  Shrinks to the budget so
    the larger-tile defaults stay safe on v7x (64 MiB physical VMEM)."""
    tq = max(8, min(_round_up(row_tile, 8), _round_up(n2, 8)))
    tc = _round_up(max(tq, min(col_tile, _round_up(n2, 8))), tq)
    while _vmem_estimate(tq, tc, d, in_itemsize) > vmem_budget:
        if tc > tq:
            tc = _round_up(max(tq, tc // 2), tq)
        elif tq > 64:
            tq = max(64, tq // 2)
            tc = tq
        else:
            break
    return tq, tc


def ntxent_loss(zis, zjs, *, batch_size, temperature,
                use_cosine_similarity=True, mxu_dtype=jnp.bfloat16,
                row_tile=512, col_tile=512):
    """Pallas NT-Xent loss. zis, zjs: (batch, dim)."""
    n = int(batch_size)
    n2 = 2 * n
    d = zis.shape[-1]
    assert zis.shape == (n, d) and zjs.shape == (n, d)
    inv_t = float(1.0 / temperature)

    # Same ordering as the PyTorch module: torch.cat([zjs, zis], dim=0).
    reps = jnp.concatenate([zjs, zis], axis=0).astype(jnp.float32)   # (2N, D)

    # Pre-normalize ONCE (cosine path); the kernel consumes rows as-is.
    # TODO(synk): reference clamps ||x_i||*||x_j|| at 1e-8; here each squared
    # row norm is clamped at 1e-12 -- only differs for near-zero embeddings.
    if use_cosine_similarity:
        sq = jnp.sum(reps * reps, axis=-1, keepdims=True)
        reps = reps * lax.rsqrt(jnp.maximum(sq, jnp.float32(1e-12)))

    # Positives hoisted out of the kernel: pos_i = <r_i, r_{(i+n) % 2n}> (f32).
    pos = jnp.sum(reps * jnp.roll(reps, -n, axis=0), axis=-1)        # (2N,)

    reps_mxu = reps.astype(mxu_dtype)
    in_itemsize = jnp.dtype(mxu_dtype).itemsize
    tq, tc = _pick_tiles(n2, d, row_tile, col_tile, in_itemsize)

    p_col = _round_up(n2, tc)        # column padding extent (multiple of tq)
    grid_rows = pl.cdiv(n2, tq)      # no dead all-padding row tiles
    grid_cols = p_col // tc
    if p_col != n2:
        reps_mxu = jnp.pad(reps_mxu, ((0, p_col - n2), (0, 0)))

    kernel = functools.partial(
        _ntxent_lse_kernel,
        n2=n2, tq=tq, tc=tc, inv_t=inv_t,
        use_cosine=bool(use_cosine_similarity),
        n_pad_cols=p_col - n2,
    )

    vmem_limit = int(min(48 * 2 ** 20,
                         max(16 * 2 ** 20,
                             2 * _vmem_estimate(tq, tc, d, in_itemsize))))

    lse = pl.pallas_call(
        kernel,
        out_shape=jax.ShapeDtypeStruct((grid_rows * tq, 1), jnp.float32),
        grid_spec=pltpu.PrefetchScalarGridSpec(
            num_scalar_prefetch=0,
            grid=(grid_rows, grid_cols),
            in_specs=[
                pl.BlockSpec((tq, d), lambda i, k: (i, 0)),   # row tile
                # If xprof ever shows exposed column DMA, add
                # pipeline_mode=pl.Buffered(3) here.
                pl.BlockSpec((tc, d), lambda i, k: (k, 0)),   # column tile
            ],
            out_specs=pl.BlockSpec((tq, 1), lambda i, k: (i, 0)),
            scratch_shapes=[
                pltpu.VMEM((tq, 1), jnp.float32),   # running max (dot path)
                pltpu.VMEM((tq, 1), jnp.float32),   # running sum-exp
            ],
        ),
        compiler_params=pltpu.CompilerParams(
            # TODO(synk): verify via xprof that the parallel row axis shards
            # across both v7x TensorCores; fall back to CORE_PARALLEL if not.
            dimension_semantics=("parallel", "arbitrary"),
            vmem_limit_bytes=vmem_limit,
        ),
    )(reps_mxu, reps_mxu)

    per_row = lse[:n2, 0] - pos * jnp.float32(inv_t)
    return jnp.sum(per_row) / jnp.float32(n2)


def _ntxent_reference(zis, zjs, *, batch_size, temperature,
                      use_cosine_similarity=True):
    """Pure-JAX reference mirroring the PyTorch forward exactly (eager only)."""
    n = batch_size
    reps = jnp.concatenate([zjs, zis], axis=0)
    if use_cosine_similarity:
        norm = jnp.sqrt(jnp.sum(reps * reps, axis=-1, keepdims=True))
        denom = jnp.maximum(norm * norm.T, 1e-8)
        sim = (reps @ reps.T) / denom
    else:
        sim = reps @ reps.T
    n2 = 2 * n
    l_pos = jnp.diagonal(sim, offset=n)
    r_pos = jnp.diagonal(sim, offset=-n)
    positives = jnp.concatenate([l_pos, r_pos]).reshape(n2, 1)
    eye0 = jnp.eye(n2, dtype=bool)
    eyep = jnp.eye(n2, k=n, dtype=bool)
    eyem = jnp.eye(n2, k=-n, dtype=bool)
    keep = ~(eye0 | eyep | eyem)
    negatives = sim[keep].reshape(n2, n2 - 2)
    logits = jnp.concatenate([positives, negatives], axis=1) / temperature
    lse = jax.scipy.special.logsumexp(logits, axis=-1)
    loss = jnp.sum(lse - logits[:, 0])
    return loss / n2


def _check(name, got, want, rtol, atol):
    got = jax.block_until_ready(got)
    assert jnp.allclose(got, want, rtol=rtol, atol=atol), (name, got, want)


if __name__ == "__main__":
    temperature = 0.5
    key = jax.random.PRNGKey(0)

    # --- small aligned batch: exact-semantics checks with f32 MXU operands ---
    batch, dim = 8, 32
    k1, k2, k3, k4 = jax.random.split(key, 4)
    zis = jax.random.normal(k1, (batch, dim), dtype=jnp.float32)
    zjs = jax.random.normal(k2, (batch, dim), dtype=jnp.float32)

    for use_cos in (True, False):
        got = ntxent_loss(zis, zjs, batch_size=batch, temperature=temperature,
                          use_cosine_similarity=use_cos, mxu_dtype=jnp.float32)
        ref = _ntxent_reference(zis, zjs, batch_size=batch,
                                temperature=temperature,
                                use_cosine_similarity=use_cos)
        _check(f"f32 cos={use_cos}", got, ref, 1e-4, 1e-4)

    # --- default bf16 MXU path (perf config), looser tolerance ---
    got = ntxent_loss(zis, zjs, batch_size=batch, temperature=temperature,
                      use_cosine_similarity=True)     # mxu_dtype=bf16 default
    ref = _ntxent_reference(zis, zjs, batch_size=batch,
                            temperature=temperature, use_cosine_similarity=True)
    _check("bf16 cos", got, ref, 3e-2, 3e-2)

    # --- unaligned batch: exercises padded-column / padded-row handling ---
    b2 = 6
    zis2 = jax.random.normal(k3, (b2, dim), dtype=jnp.float32)
    zjs2 = jax.random.normal(k4, (b2, dim), dtype=jnp.float32)
    for use_cos in (True, False):
        got = ntxent_loss(zis2, zjs2, batch_size=b2, temperature=temperature,
                          use_cosine_similarity=use_cos, mxu_dtype=jnp.float32)
        ref = _ntxent_reference(zis2, zjs2, batch_size=b2,
                                temperature=temperature,
                                use_cosine_similarity=use_cos)
        _check(f"pad cos={use_cos}", got, ref, 1e-4, 1e-4)

    # --- multi-tile grid (3x3): online LSE across column tiles + diag gating ---
    b3, d3 = 96, 32
    k5, k6 = jax.random.split(k4)
    zis3 = jax.random.normal(k5, (b3, d3), dtype=jnp.float32)
    zjs3 = jax.random.normal(k6, (b3, d3), dtype=jnp.float32)
    for use_cos in (True, False):
        got = ntxent_loss(zis3, zjs3, batch_size=b3, temperature=temperature,
                          use_cosine_similarity=use_cos, mxu_dtype=jnp.float32,
                          row_tile=64, col_tile=64)
        ref = _ntxent_reference(zis3, zjs3, batch_size=b3,
                                temperature=temperature,
                                use_cosine_similarity=use_cos)
        _check(f"multi-tile f32 cos={use_cos}", got, ref, 1e-4, 1e-4)
    got = ntxent_loss(zis3, zjs3, batch_size=b3, temperature=temperature,
                      use_cosine_similarity=True, row_tile=64, col_tile=64)
    _check("multi-tile bf16 cos", got,
           _ntxent_reference(zis3, zjs3, batch_size=b3,
                             temperature=temperature,
                             use_cosine_similarity=True), 3e-2, 3e-2)

    print("KERNEL_OK")
</pallas_src>

<mosaic_0001>
module attributes {stable_mosaic.version = 11 : i64} {
  func.func @_ntxent_lse_kernel(%arg0: i32, %arg1: i32, %arg2: memref<16x32xf32, #tpu.memory_space<vmem>>, %arg3: memref<16x32xf32, #tpu.memory_space<vmem>>, %arg4: memref<16x1xf32, #tpu.memory_space<vmem>>, %arg5: memref<16x1xf32, #tpu.memory_space<vmem>>, %arg6: memref<16x1xf32, #tpu.memory_space<vmem>>) attributes {dimension_semantics = [#tpu.dimension_semantics<parallel>, #tpu.dimension_semantics<arbitrary>], iteration_bounds = array<i64: 1, 1>, scalar_prefetch = 0 : i64, scratch_operands = 2 : i64, tpu.core_type = #tpu.core_type<tc>, window_params = [{transform_indices = @transform_0, window_bounds = array<i64: 16, 32>}, {transform_indices = @transform_1, window_bounds = array<i64: 16, 32>}, {transform_indices = @transform_2, window_bounds = array<i64: 16, 1>}]} {
    %c16_i32 = arith.constant 16 : i32
    %0 = arith.muli %arg0, %c16_i32 : i32
    %c16_i32_0 = arith.constant 16 : i32
    %1 = arith.muli %arg1, %c16_i32_0 : i32
    %c0_i32 = arith.constant 0 : i32
    %2 = arith.cmpi eq, %arg1, %c0_i32 : i32
    %3 = arith.extui %2 : i1 to i32
    %c0_i32_1 = arith.constant 0 : i32
    %4 = arith.cmpi ne, %3, %c0_i32_1 : i32
    scf.if %4 {
      %cst_17 = arith.constant 0.000000e+00 : f32
      %28 = vector.broadcast %cst_17 : f32 to vector<16x1xf32>
      %c0_18 = arith.constant 0 : index
      %c0_19 = arith.constant 0 : index
      %29 = vector.load %arg6[%c0_18, %c0_19] : memref<16x1xf32, #tpu.memory_space<vmem>>, vector<16x1xf32>
      tpu.vector_store %arg6[%c0_18, %c0_19], %28 {strides = array<i32>} : memref<16x1xf32, #tpu.memory_space<vmem>>, vector<16x1xf32>,
    } else {
    }
    %c0 = arith.constant 0 : index
    %c0_2 = arith.constant 0 : index
    %5 = vector.load %arg2[%c0, %c0_2] : memref<16x32xf32, #tpu.memory_space<vmem>>, vector<16x32xf32>
    %c0_3 = arith.constant 0 : index
    %c0_4 = arith.constant 0 : index
    %6 = vector.load %arg3[%c0_3, %c0_4] : memref<16x32xf32, #tpu.memory_space<vmem>>, vector<16x32xf32>
    %cst = arith.constant dense<0.000000e+00> : vector<16x16xf32>
    %7 = tpu.matmul %5, %6, %cst {dimension_numbers = #tpu.dot_dimension_numbers<[1], [1], [0], [0], [0, 0, 1, 0], [], []>} : vector<16x32xf32>, vector<16x32xf32>, vector<16x16xf32> -> vector<16x16xf32>
    %cst_5 = arith.constant 2.000000e+00 : f32
    %8 = vector.broadcast %cst_5 : f32 to vector<16x16xf32>
    %9 = arith.mulf %7, %8 : vector<16x16xf32>
    %cst_6 = arith.constant 2.000000e+00 : f32
    %10 = vector.broadcast %cst_6 : f32 to vector<16x16xf32>
    %11 = arith.subf %9, %10 : vector<16x16xf32>
    %12 = math.exp %11 : vector<16x16xf32>
    %c0_7 = arith.constant 0 : index
    %c0_8 = arith.constant 0 : index
    %13 = vector.load %arg6[%c0_7, %c0_8] : memref<16x1xf32, #tpu.memory_space<vmem>>, vector<16x1xf32>
    %cst_9 = arith.constant dense<0.000000e+00> : vector<16xf32>
    %14 = vector.multi_reduction <add>, %12, %cst_9 [1] : vector<16x16xf32> to vector<16xf32>
    %15 = vector.shape_cast %14 : vector<16xf32> to vector<16x1xf32>
    %16 = arith.addf %13, %15 : vector<16x1xf32>
    %c0_10 = arith.constant 0 : index
    %c0_11 = arith.constant 0 : index
    %17 = vector.load %arg6[%c0_10, %c0_11] : memref<16x1xf32, #tpu.memory_space<vmem>>, vector<16x1xf32>
    tpu.vector_store %arg6[%c0_10, %c0_11], %16 {strides = array<i32>} : memref<16x1xf32, #tpu.memory_space<vmem>>, vector<16x1xf32>,
    %c16_i32_12 = arith.constant 16 : i32
    %18 = arith.addi %1, %c16_i32_12 : i32
    %19 = arith.cmpi slt, %0, %18 : i32
    %c16_i32_13 = arith.constant 16 : i32
    %20 = arith.addi %0, %c16_i32_13 : i32
    %21 = arith.cmpi slt, %1, %20 : i32
    %22 = arith.andi %19, %21 : i1
    %23 = arith.extui %22 : i1 to i32
    %c0_i32_14 = arith.constant 0 : i32
    %24 = arith.cmpi ne, %23, %c0_i32_14 : i32
    scf.if %24 {
      %28 = tpu.iota {dimensions = array<i32: 0>} : vector<16x16xi32>
      %29 = vector.broadcast %0 : i32 to vector<16x16xi32>
      %30 = arith.addi %29, %28 : vector<16x16xi32>
      %31 = tpu.iota {dimensions = array<i32: 1>} : vector<16x16xi32>
      %32 = vector.broadcast %1 : i32 to vector<16x16xi32>
      %33 = arith.addi %32, %31 : vector<16x16xi32>
      %34 = arith.cmpi eq, %30, %33 : vector<16x16xi32>
      %c0_17 = arith.constant 0 : index
      %c0_18 = arith.constant 0 : index
      %35 = vector.load %arg6[%c0_17, %c0_18] : memref<16x1xf32, #tpu.memory_space<vmem>>, vector<16x1xf32>
      %cst_19 = arith.constant 0.000000e+00 : f32
      %36 = vector.broadcast %cst_19 : f32 to vector<16x16xf32>
      %37 = arith.select %34, %12, %36 : vector<16x16xi1>, vector<16x16xf32>
      %cst_20 = arith.constant dense<0.000000e+00> : vector<16xf32>
      %38 = vector.multi_reduction <add>, %37, %cst_20 [1] : vector<16x16xf32> to vector<16xf32>
      %39 = vector.shape_cast %38 : vector<16xf32> to vector<16x1xf32>
      %40 = arith.subf %35, %39 : vector<16x1xf32>
      %c0_21 = arith.constant 0 : index
      %c0_22 = arith.constant 0 : index
      %41 = vector.load %arg6[%c0_21, %c0_22] : memref<16x1xf32, #tpu.memory_space<vmem>>, vector<16x1xf32>
      tpu.vector_store %arg6[%c0_21, %c0_22], %40 {strides = array<i32>} : memref<16x1xf32, #tpu.memory_space<vmem>>, vector<16x1xf32>,
    } else {
    }
    %c0_i32_15 = arith.constant 0 : i32
    %25 = arith.cmpi eq, %arg1, %c0_i32_15 : i32
    %26 = arith.extui %25 : i1 to i32
    %c0_i32_16 = arith.constant 0 : i32
    %27 = arith.cmpi ne, %26, %c0_i32_16 : i32
    scf.if %27 {
      %c0_17 = arith.constant 0 : index
      %c0_18 = arith.constant 0 : index
      %28 = vector.load %arg6[%c0_17, %c0_18] : memref<16x1xf32, #tpu.memory_space<vmem>>, vector<16x1xf32>
      %29 = math.log %28 : vector<16x1xf32>
      %cst_19 = arith.constant 2.000000e+00 : f32
      %30 = vector.broadcast %cst_19 : f32 to vector<16x1xf32>
      %31 = arith.addf %29, %30 : vector<16x1xf32>
      %c0_20 = arith.constant 0 : index
      %c0_21 = arith.constant 0 : index
      %32 = vector.load %arg4[%c0_20, %c0_21] : memref<16x1xf32, #tpu.memory_space<vmem>>, vector<16x1xf32>
      tpu.vector_store %arg4[%c0_20, %c0_21], %31 {strides = array<i32>} : memref<16x1xf32, #tpu.memory_space<vmem>>, vector<16x1xf32>,
    } else {
    }
    return
  }
  func.func @transform_0(%arg0: i32, %arg1: i32) -> (i32, i32) {
    %c0_i32 = arith.constant 0 : i32
    %c0_i32_0 = arith.constant 0 : i32
    return %arg0, %c0_i32 : i32, i32
  }
  func.func @transform_1(%arg0: i32, %arg1: i32) -> (i32, i32) {
    %c0_i32 = arith.constant 0 : i32
    %c0_i32_0 = arith.constant 0 : i32
    return %arg1, %c0_i32 : i32, i32
  }
  func.func @transform_2(%arg0: i32, %arg1: i32) -> (i32, i32) {
    %c0_i32 = arith.constant 0 : i32
    %c0_i32_0 = arith.constant 0 : i32
    return %arg0, %c0_i32 : i32, i32
  }
}

</mosaic_0001>

<llo_original>
// kernel: tpu_custom_call.1
$region0: #{tpu_custom_call.1}
  #allocation0 [shape = 'u32[]', space=smem, size = 0x4, offset = 0x4, fixed_abs, tag = 'smem constant byte address 0x4 - core index']
  #allocation1 [shape = 'u32[72,128]{1,0:T(1,128)}', space=vmem, size = 0x9000, scoped, tag = 'internal scratch']
  #allocation2 [shape = 'f32[16,1]{1,0:T(8,128)}', space=vmem, size = 0x2000, scoped, tag = 'scratch operand']
  #allocation3 [shape = 'f32[16,1]{1,0:T(8,128)}', space=vmem, size = 0x2000, scoped, tag = 'scratch operand']
  %s0 = inlined_call_operand.hbm [shape: f32[16,32], index: 0, kind: input, shape index: {}]
  %s1 = inlined_call_operand.hbm [shape: f32[16,32], index: 1, kind: input, shape index: {}]
  %s2 = inlined_call_operand.vmem [shape: f32[16,1], index: 2, kind: output, shape index: {}]
  %s3 = sld [smem:[#allocation0]]
  $region38: #{tpu_custom_call.1} parent=0
    _
  %s5 = ssub.s32 1, %s3
  %s6 = scalar_select 0, %s5, %s3
  $region1: #{tpu_custom_call.1} parent=0
    #allocation4 [shape = 'u8[8192]{0}', space=vmem, size = 0x2000, scoped, tag = 'input window, operand 0, single buffered']
    #allocation5 [shape = 's32[1]{0}', space=sflag, size = 0x4, scoped, tag = 'scoped memory for tpu_custom_call.1']
    #allocation6 [shape = 'u8[8192]{0}', space=vmem, size = 0x2000, scoped, tag = 'input window, operand 1, single buffered']
    #allocation7 [shape = 's32[1]{0}', space=sflag, size = 0x4, scoped, tag = 'scoped memory for tpu_custom_call.1']
    %7 = vsyncpa [#allocation5], 0
    %8 = vsyncpa [#allocation7], 0
    // Predicated region
    $region2: #{tpu_custom_call.1} parent=1 // pred_check
      _
    $region3: #{tpu_custom_call.1} parent=1 // pred_check_branch
      %10 = sbr.rel (0) target = $region5
    $region4: #{tpu_custom_call.1} parent=1 // pred_region
      %12 = vsyncadd [#allocation5], 0
      %s13 = sshll.u32 %s0, 4
      %s14 = int_to_ptr.hbm [resolvable:$true] %s13
      %s15 = sshll.u32 [#allocation4], 4
      %s16 = int_to_ptr.vmem [resolvable:$true] %s15
      %21 = dma.hbm_to_vmem [thread:$0]  %s14, 256, %s16, [#allocation5], 128, 128, 8
    $region5: #{tpu_custom_call.1} parent=1 // pred_fallthru
      _
    // Predicated region
    $region6: #{tpu_custom_call.1} parent=1 // pred_check
      _
    $region7: #{tpu_custom_call.1} parent=1 // pred_check_branch
      %23 = sbr.rel (0) target = $region9
    $region8: #{tpu_custom_call.1} parent=1 // pred_region
      %25 = vsyncadd [#allocation7], 0
      %s26 = sshll.u32 %s1, 4
      %s27 = int_to_ptr.hbm [resolvable:$true] %s26
      %s28 = sshll.u32 [#allocation6], 4
      %s29 = int_to_ptr.vmem [resolvable:$true] %s28
      %34 = dma.hbm_to_vmem [thread:$0]  %s27, 256, %s29, [#allocation7], 128, 128, 8
    $region9: #{tpu_custom_call.1} parent=1 // pred_fallthru
      _
    // Predicated region
    $region10: #{tpu_custom_call.1} parent=1 // pred_check
      _
    $region11: #{tpu_custom_call.1} parent=1 // pred_check_branch
      %36 = sbr.rel (0) target = $region13
    $region12: #{tpu_custom_call.1} parent=1 // pred_region
      %38 = dma.done [#allocation5], 256
    $region13: #{tpu_custom_call.1} parent=1 // pred_fallthru
      _
    // Predicated region
    $region14: #{tpu_custom_call.1} parent=1 // pred_check
      _
    $region15: #{tpu_custom_call.1} parent=1 // pred_check_branch
      %40 = sbr.rel (0) target = $region17
    $region16: #{tpu_custom_call.1} parent=1 // pred_region
      %42 = dma.done [#allocation7], 256
    $region17: #{tpu_custom_call.1} parent=1 // pred_fallthru
      _
    %s43 = smul.u32 0, 16
    %s44 = smul.u32 0, 16
    %p45 = scmp.eq.s32.totalorder 0, 0
    // Predicated region
    $region18: #{tpu_custom_call.1} parent=1 // pred_check
      %p46 = pneg %p45
    $region19: #{tpu_custom_call.1} parent=1 // pred_check_branch
      %48 = sbr.rel (%p46) target = $region21
    $region20: #{tpu_custom_call.1} parent=1 // pred_region
      %vm49 = vcmask 7168
      %50 = vst.msk [vmem:[#allocation3] sm:$0xff] %vm49, 0.0
      %51 = vst.msk [vmem:[#allocation3 + $0x8] sm:$0xff] %vm49, 0.0
    $region21: #{tpu_custom_call.1} parent=1 // pred_fallthru
      _
    %v52 = vld [vmem:[#allocation4] sm:$0xff]
    %v53 = vld [vmem:[#allocation4 + $0x8] sm:$0xff]
    %v54 = vld [vmem:[#allocation6] sm:$0xff]
    %v55 = vld [vmem:[#allocation6 + $0x8] sm:$0xff]
    %vm56 = vcmask 261120
    %v58 = vsel %vm56, %v52, 0
    %v61 = vsel %vm56, %v53, 0
    %v64 = vsel %vm56, %v54, 0
    %v67 = vsel %vm56, %v55, 0
    %69 = vmatpush.xpose.msra.mxu0 0.0
    %70 = vmatpush.xpose.msra.mxu0 0.0
    %71 = vmatpush.xpose.msra.mxu0 0.0
    %72 = vmatpush.xpose.msra.mxu0 0.0
    %73 = vmatpush.xpose.msra.mxu0 0.0
    %74 = vmatpush.xpose.msra.mxu0 0.0
    %75 = vmatpush.xpose.msra.mxu0 0.0
    %76 = vmatpush.xpose.msra.mxu0 0.0
    %77 = vmatpush.xpose.msra.mxu0 0.0
    %78 = vmatpush.xpose.msra.mxu0 0.0
    %79 = vmatpush.xpose.msra.mxu0 0.0
    %80 = vmatpush.xpose.msra.mxu0 0.0
    %81 = vmatpush.xpose.msra.mxu0 0.0
    %82 = vmatpush.xpose.msra.mxu0 0.0
    %83 = vmatpush.xpose.msra.mxu0 %v67
    %84 = vmatpush.xpose.msra.mxu0 %v64
    %85 = vmatmul.f32.gmra.mxu0 %v58
    %v86 = vpop.f32.mrf.mxu0
    %v87 = vadd.f32 0.0, %v86
    %88 = vmatmul.f32.gmra.mxu0 %v61
    %v89 = vpop.f32.mrf.mxu0
    %v90 = vadd.f32 0.0, %v89
    %91 = vdwg.mxu0
    %v92 = vmul.f32 %v87, 2.0
    %v93 = vmul.f32 %v90, 2.0
    %v94 = vsub.f32 %v92, 2.0
    %v95 = vsub.f32 %v93, 2.0
    %v96 = vmul.f32 %v94, 1.442695
    %v97 = vpow.pop %v96
    %v98 = vmul.f32 %v95, 1.442695
    %v99 = vpow.pop %v98
    %v100 = vld [vmem:[#allocation3] sm:$0xff]
    %v101 = vld [vmem:[#allocation3 + $0x8] sm:$0xff]
    %vm102 = vcmask 130048
    %v103 = vsel %vm102, %v97, 0.0
    %104 = vadd.xlane.f32.xlu0 %v103
    %v105 = vpop.xlane.xlu0 %104
    %v106 = vsel %vm102, %v99, 0.0
    %107 = vadd.xlane.f32.xlu0 %v106
    %v108 = vpop.xlane.xlu0 %107
    %v109 = vadd.f32 %v100, %v105
    %v110 = vadd.f32 %v101, %v108
    %vm111 = vcmask 7168
    %112 = vst.msk [vmem:[#allocation3] sm:$0xff] %vm111, %v109
    %113 = vst.msk [vmem:[#allocation3 + $0x8] sm:$0xff] %vm111, %v110
    %s114 = sadd.s32 %s44, 16
    %p115 = scmp.lt.s32.totalorder %s43, %s114
    %s116 = sadd.s32 %s43, 16
    %p117 = scmp.lt.s32.totalorder %s44, %s116
    %p118 = pnand %p115, %p117
    %p119 = pneg %p118
    // Predicated region
    $region22: #{tpu_custom_call.1} parent=1 // pred_check
      _
    $region23: #{tpu_custom_call.1} parent=1 // pred_check_branch
      %121 = sbr.rel (%p118) target = $region25
    $region24: #{tpu_custom_call.1} parent=1 // pred_region
      %v122 = vlaneseq
      %v123 = vshrl.u32 %v122, 7
      %v124 = vadd.s32 %v123, 8
      %v125 = vstv %s43
      %v126 = vadd.s32 %v125, %v123
      %v127 = vadd.s32 %v125, %v124
      %v128 = vlaneseq
      %v129 = vand.u32 %v128, 127
      %v130 = vstv %s44
      %v131 = vadd.s32 %v130, %v129
      %vm132 = vcmp.eq.s32.totalorder %v126, %v131
      %vm133 = vcmp.eq.s32.totalorder %v127, %v131
      %v134 = vld [vmem:[#allocation3] sm:$0xff]
      %v135 = vld [vmem:[#allocation3 + $0x8] sm:$0xff]
      %v136 = vsel %vm132, %v97, 0.0
      %v137 = vsel %vm133, %v99, 0.0
      %v138 = vsel %vm102, %v136, 0.0
      %139 = vadd.xlane.f32.xlu0 %v138
      %v140 = vpop.xlane.xlu0 %139
      %v141 = vsel %vm102, %v137, 0.0
      %142 = vadd.xlane.f32.xlu0 %v141
      %v143 = vpop.xlane.xlu0 %142
      %v144 = vsub.f32 %v134, %v140
      %v145 = vsub.f32 %v135, %v143
      %146 = vst.msk [vmem:[#allocation3] sm:$0xff] %vm111, %v144
      %147 = vst.msk [vmem:[#allocation3 + $0x8] sm:$0xff] %vm111, %v145
    $region25: #{tpu_custom_call.1} parent=1 // pred_fallthru
      _
    // Predicated region
    $region26: #{tpu_custom_call.1} parent=1 // pred_check
      %p148 = pneg %p45
    $region27: #{tpu_custom_call.1} parent=1 // pred_check_branch
      %150 = sbr.rel (%p148) target = $region29
    $region28: #{tpu_custom_call.1} parent=1 // pred_region
      %v151 = vld [vmem:[#allocation3] sm:$0xff]
      %v152 = vld [vmem:[#allocation3 + $0x8] sm:$0xff]
      %v153 = vlog2.pop %v151
      %v154 = vmul.f32 %v153, 0.6931472
      %v155 = vlog2.pop %v152
      %v156 = vmul.f32 %v155, 0.6931472
      %v157 = vadd.f32 %v154, 2.0
      %v158 = vadd.f32 %v156, 2.0
      %159 = vst.msk [vmem:[%s2] sm:$0xff] %vm111, %v157
      %160 = vst.msk [vmem:[%s2 + $0x8] sm:$0xff] %vm111, %v158
    $region29: #{tpu_custom_call.1} parent=1 // pred_fallthru
      _
    // Predicated region
    $region30: #{tpu_custom_call.1} parent=1 // pred_check
      _
    $region31: #{tpu_custom_call.1} parent=1 // pred_check_branch
      %162 = sbr.rel (0) target = $region33
    $region32: #{tpu_custom_call.1} parent=1 // pred_region
      _
    $region33: #{tpu_custom_call.1} parent=1 // pred_fallthru
      _
    // Predicated region
    $region34: #{tpu_custom_call.1} parent=1 // pred_check
      _
    $region35: #{tpu_custom_call.1} parent=1 // pred_check_branch
      %164 = sbr.rel (0) target = $region37
    $region36: #{tpu_custom_call.1} parent=1 // pred_region
      _
    $region37: #{tpu_custom_call.1} parent=1 // pred_fallthru
      _
    %165 = vsyncpa [#allocation5], 1
    %166 = vsyncpa [#allocation7], 1

</llo_original>
